<compile_context>
chip_gen: v6e
topology: v6e:2x2x1
jax: 0.10.0
libtpu: 0.0.40
codegen_flags: <defaults>
</compile_context>

<pallas_src>
import functools

import jax
import jax.numpy as jnp
from jax.experimental import pallas as pl
from jax.experimental.pallas import tpu as pltpu


# --------------------------------------------------------------------------
# Pass 1: per-batch per-channel sum / sum-of-squares of z = W x + b.
# x_ref: (C_in, TM)   w_ref: (C_out, C_in)   b_ref: (C_out, 1)
# sum_ref / ssq_ref: (C_out, 1) accumulators, resident across the pixel axis.
# --------------------------------------------------------------------------
def _stats_kernel(x_ref, w_ref, b_ref, sum_ref, ssq_ref):
    j = pl.program_id(1)  # pixel-tile index (reduction axis, innermost)

    z = jnp.dot(w_ref[...], x_ref[...], preferred_element_type=jnp.float32)
    z = z + b_ref[...]  # (C_out, TM) + (C_out, 1)

    @pl.when(j == 0)
    def _():
        sum_ref[...] = jnp.zeros_like(sum_ref)
        ssq_ref[...] = jnp.zeros_like(ssq_ref)

    # Lane-axis reductions go to the XLU (otherwise idle here).
    # TODO(synk): E[z^2]-E[z]^2 in f32 can lose precision for large-|mean| data;
    # a centered second reduction would be safer if that regime matters.
    sum_ref[...] += jnp.sum(z, axis=1, keepdims=True)
    ssq_ref[...] += jnp.sum(z * z, axis=1, keepdims=True)


# --------------------------------------------------------------------------
# Pass 2: fused 1x1 conv + BatchNorm (folded into W', b') + ReLU.
# --------------------------------------------------------------------------
def _fused_conv_bn_relu_kernel(x_ref, w_ref, b_ref, o_ref):
    z = jnp.dot(w_ref[...], x_ref[...], preferred_element_type=jnp.float32)
    o_ref[...] = jnp.maximum(z + b_ref[...], 0.0).astype(o_ref.dtype)


def _pick_pixel_tile(hw, c_in, c_out):
    """Largest multiple-of-128 divisor of hw, bounded by a per-buffer VMEM budget."""
    if hw % 128 != 0:
        # TODO(synk): pad/mask the pixel axis instead of a full-extent block so
        # very large non-128-multiple spatial sizes stay inside v7x's 64 MiB VMEM.
        return hw
    # Keep each double-buffered f32 operand tile under ~4 MiB.
    bytes_per_lane = 4 * 2 * max(c_in, c_out)
    cap = max(128, ((4 << 20) // bytes_per_lane) // 128 * 128)
    t = min(hw, cap)
    while hw % t != 0:
        t -= 128
    return t


@functools.partial(jax.jit, static_argnames=("eps",))
def feature_adapter_forward(x_nchw, conv_w, conv_b, bn_gamma, bn_beta, eps=1e-5):
    """x_nchw: (N, C_in, H, W) f32. conv_w: (C_out, C_in, 1, 1). Returns (N, C_out, H, W)."""
    N, C_in, H, W = x_nchw.shape
    C_out = conv_w.shape[0]
    HW = H * W
    M = N * HW

    # Channels-first, no transpose: NCHW is already channel-major.
    x = x_nchw.reshape(N, C_in, HW).astype(jnp.float32)
    w = conv_w.reshape(C_out, C_in).astype(jnp.float32)      # (C_out, C_in)
    b = conv_b.reshape(C_out, 1).astype(jnp.float32)         # (C_out, 1)

    TM = _pick_pixel_tile(HW, C_in, C_out)
    n_tiles = HW // TM
    grid = (N, n_tiles)

    # ---- pass 1: batch statistics of z = W x + b (tiny outputs only) ----
    z_sum, z_ssq = pl.pallas_call(
        _stats_kernel,
        out_shape=(
            jax.ShapeDtypeStruct((N, C_out, 1), jnp.float32),
            jax.ShapeDtypeStruct((N, C_out, 1), jnp.float32),
        ),
        grid_spec=pltpu.PrefetchScalarGridSpec(
            num_scalar_prefetch=0,
            grid=grid,
            in_specs=[
                pl.BlockSpec((None, C_in, TM), lambda n, j: (n, 0, j)),
                pl.BlockSpec((C_out, C_in), lambda n, j: (0, 0)),
                pl.BlockSpec((C_out, 1), lambda n, j: (0, 0)),
            ],
            out_specs=[
                pl.BlockSpec((None, C_out, 1), lambda n, j: (n, 0, 0)),  # accumulator
                pl.BlockSpec((None, C_out, 1), lambda n, j: (n, 0, 0)),  # accumulator
            ],
        ),
        compiler_params=pltpu.CompilerParams(
            # batch axis is independent (megacore-shardable); pixel axis carries
            # the per-batch accumulator so it must stay sequential.
            dimension_semantics=("parallel", "arbitrary"),
        ),
    )(x, w, b)

    # ---- tiny per-channel glue: fold BN into the conv weights/bias ----
    total_sum = jnp.sum(z_sum, axis=0)          # (C_out, 1)
    total_ssq = jnp.sum(z_ssq, axis=0)          # (C_out, 1)
    mean = total_sum / M
    var = total_ssq / M - mean * mean           # biased variance (BN normalization)
    scale = bn_gamma.reshape(C_out, 1) * jax.lax.rsqrt(var + eps)
    shift = bn_beta.reshape(C_out, 1) - mean * scale
    w_fused = scale * w                         # (C_out, C_in)
    b_fused = scale * b + shift                 # (C_out, 1)

    # ---- pass 2: fused conv + BN + ReLU, lane-dense output ----
    y = pl.pallas_call(
        _fused_conv_bn_relu_kernel,
        out_shape=jax.ShapeDtypeStruct((N, C_out, HW), jnp.float32),
        grid_spec=pltpu.PrefetchScalarGridSpec(
            num_scalar_prefetch=0,
            grid=grid,
            in_specs=[
                pl.BlockSpec((None, C_in, TM), lambda n, j: (n, 0, j)),
                pl.BlockSpec((C_out, C_in), lambda n, j: (0, 0)),
                pl.BlockSpec((C_out, 1), lambda n, j: (0, 0)),
            ],
            out_specs=pl.BlockSpec((None, C_out, TM), lambda n, j: (n, 0, j)),
        ),
        compiler_params=pltpu.CompilerParams(
            dimension_semantics=("parallel", "parallel"),
        ),
    )(x, w_fused, b_fused)

    return y.reshape(N, C_out, H, W)


def init_params(key, in_channels, out_channels):
    k_w, k_b, k_g, k_bt = jax.random.split(key, 4)
    fan_in = in_channels  # kernel_size = 1
    bound = 1.0 / jnp.sqrt(fan_in)
    conv_w = jax.random.uniform(k_w, (out_channels, in_channels, 1, 1),
                                minval=-bound, maxval=bound, dtype=jnp.float32)
    conv_b = jax.random.uniform(k_b, (out_channels,),
                                minval=-bound, maxval=bound, dtype=jnp.float32)
    # BN affine params (PyTorch default init is gamma=1, beta=0; perturb slightly
    # but deterministically so the affine path is exercised).
    bn_gamma = 1.0 + 0.1 * jax.random.normal(k_g, (out_channels,), dtype=jnp.float32)
    bn_beta = 0.1 * jax.random.normal(k_bt, (out_channels,), dtype=jnp.float32)
    return conv_w, conv_b, bn_gamma, bn_beta


def _reference(x, conv_w, conv_b, gamma, beta, eps=1e-5):
    """Pure-JAX reference: Conv2d(1x1) -> BatchNorm2d (training stats) -> ReLU."""
    C_out, C_in = conv_w.shape[0], conv_w.shape[1]
    w = conv_w.reshape(C_out, C_in)
    z = jnp.einsum("oc,nchw->nohw", w, x) + conv_b.reshape(1, C_out, 1, 1)
    mean = z.mean(axis=(0, 2, 3), keepdims=True)
    var = z.var(axis=(0, 2, 3), keepdims=True)  # biased
    zn = (z - mean) * jax.lax.rsqrt(var + eps)
    return jnp.maximum(zn * gamma.reshape(1, C_out, 1, 1) + beta.reshape(1, C_out, 1, 1), 0.0)


if __name__ == "__main__":
    key = jax.random.PRNGKey(0)
    k_x, k_p = jax.random.split(key)

    N, C_in, H, W = 2, 4, 16, 16
    C_out = 8

    x = jax.random.normal(k_x, (N, C_in, H, W), dtype=jnp.float32)
    conv_w, conv_b, bn_gamma, bn_beta = init_params(k_p, C_in, C_out)

    y = feature_adapter_forward(x, conv_w, conv_b, bn_gamma, bn_beta)
    y = jax.block_until_ready(y)

    assert y.shape == (N, C_out, H, W), y.shape
    assert bool(jnp.all(y >= 0.0))  # ReLU output

    y_ref = _reference(x, conv_w, conv_b, bn_gamma, bn_beta)
    max_err = float(jnp.max(jnp.abs(y - y_ref)))
    assert max_err < 1e-3, f"mismatch vs reference: {max_err}"

    print("KERNEL_OK")
</pallas_src>

<mosaic_0001>
module attributes {stable_mosaic.version = 11 : i64} {
  func.func @_stats_kernel(%arg0: i32, %arg1: i32, %arg2: memref<1x4x256xf32, #tpu.memory_space<vmem>>, %arg3: memref<8x4xf32, #tpu.memory_space<vmem>>, %arg4: memref<8x1xf32, #tpu.memory_space<vmem>>, %arg5: memref<1x8x1xf32, #tpu.memory_space<vmem>>, %arg6: memref<1x8x1xf32, #tpu.memory_space<vmem>>) attributes {dimension_semantics = [#tpu.dimension_semantics<parallel>, #tpu.dimension_semantics<arbitrary>], iteration_bounds = array<i64: 2, 1>, scalar_prefetch = 0 : i64, scratch_operands = 0 : i64, tpu.core_type = #tpu.core_type<tc>, window_params = [{transform_indices = @transform_0, window_bounds = array<i64: 1, 4, 256>}, {pipeline_mode = #tpu.pipeline_mode<synchronous>, transform_indices = @transform_1, window_bounds = array<i64: 8, 4>}, {pipeline_mode = #tpu.pipeline_mode<synchronous>, transform_indices = @transform_2, window_bounds = array<i64: 8, 1>}, {transform_indices = @transform_3, window_bounds = array<i64: 1, 8, 1>}, {transform_indices = @transform_4, window_bounds = array<i64: 1, 8, 1>}]} {
    %c0 = arith.constant 0 : index
    %c0_0 = arith.constant 0 : index
    %0 = vector.load %arg3[%c0, %c0_0] : memref<8x4xf32, #tpu.memory_space<vmem>>, vector<8x4xf32>
    %c0_1 = arith.constant 0 : index
    %c0_2 = arith.constant 0 : index
    %c0_3 = arith.constant 0 : index
    %1 = vector.load %arg2[%c0_1, %c0_2, %c0_3] : memref<1x4x256xf32, #tpu.memory_space<vmem>>, vector<1x4x256xf32>
    %2 = vector.shape_cast %1 : vector<1x4x256xf32> to vector<4x256xf32>
    %cst = arith.constant dense<0.000000e+00> : vector<8x256xf32>
    %3 = tpu.matmul %0, %2, %cst {dimension_numbers = #tpu.dot_dimension_numbers<[1], [0], [0], [1], [0, 0, 1, 1], [], []>} : vector<8x4xf32>, vector<4x256xf32>, vector<8x256xf32> -> vector<8x256xf32>
    %c0_4 = arith.constant 0 : index
    %c0_5 = arith.constant 0 : index
    %4 = vector.load %arg4[%c0_4, %c0_5] : memref<8x1xf32, #tpu.memory_space<vmem>>, vector<8x1xf32>
    %5 = vector.broadcast %4 : vector<8x1xf32> to vector<8x256xf32>
    %6 = arith.addf %3, %5 : vector<8x256xf32>
    %c0_i32 = arith.constant 0 : i32
    %7 = arith.cmpi eq, %arg1, %c0_i32 : i32
    %8 = arith.extui %7 : i1 to i32
    %c0_i32_6 = arith.constant 0 : i32
    %9 = arith.cmpi ne, %8, %c0_i32_6 : i32
    scf.if %9 {
      %cst_21 = arith.constant 0.000000e+00 : f32
      %27 = vector.broadcast %cst_21 : f32 to vector<8x1xf32>
      %c0_22 = arith.constant 0 : index
      %c0_23 = arith.constant 0 : index
      %c0_24 = arith.constant 0 : index
      %28 = vector.load %arg5[%c0_22, %c0_23, %c0_24] : memref<1x8x1xf32, #tpu.memory_space<vmem>>, vector<1x8x1xf32>
      %29 = vector.shape_cast %28 : vector<1x8x1xf32> to vector<8x1xf32>
      %30 = vector.shape_cast %27 : vector<8x1xf32> to vector<1x8x1xf32>
      tpu.vector_store %arg5[%c0_22, %c0_23, %c0_24], %30 {strides = array<i32>} : memref<1x8x1xf32, #tpu.memory_space<vmem>>, vector<1x8x1xf32>,
      %cst_25 = arith.constant 0.000000e+00 : f32
      %31 = vector.broadcast %cst_25 : f32 to vector<8x1xf32>
      %c0_26 = arith.constant 0 : index
      %c0_27 = arith.constant 0 : index
      %c0_28 = arith.constant 0 : index
      %32 = vector.load %arg6[%c0_26, %c0_27, %c0_28] : memref<1x8x1xf32, #tpu.memory_space<vmem>>, vector<1x8x1xf32>
      %33 = vector.shape_cast %32 : vector<1x8x1xf32> to vector<8x1xf32>
      %34 = vector.shape_cast %31 : vector<8x1xf32> to vector<1x8x1xf32>
      tpu.vector_store %arg6[%c0_26, %c0_27, %c0_28], %34 {strides = array<i32>} : memref<1x8x1xf32, #tpu.memory_space<vmem>>, vector<1x8x1xf32>,
    } else {
    }
    %c0_7 = arith.constant 0 : index
    %c0_8 = arith.constant 0 : index
    %c0_9 = arith.constant 0 : index
    %10 = vector.load %arg5[%c0_7, %c0_8, %c0_9] : memref<1x8x1xf32, #tpu.memory_space<vmem>>, vector<1x8x1xf32>
    %11 = vector.shape_cast %10 : vector<1x8x1xf32> to vector<8x1xf32>
    %cst_10 = arith.constant dense<0.000000e+00> : vector<8xf32>
    %12 = vector.multi_reduction <add>, %6, %cst_10 [1] : vector<8x256xf32> to vector<8xf32>
    %13 = vector.shape_cast %12 : vector<8xf32> to vector<8x1xf32>
    %14 = arith.addf %11, %13 : vector<8x1xf32>
    %c0_11 = arith.constant 0 : index
    %c0_12 = arith.constant 0 : index
    %c0_13 = arith.constant 0 : index
    %15 = vector.load %arg5[%c0_11, %c0_12, %c0_13] : memref<1x8x1xf32, #tpu.memory_space<vmem>>, vector<1x8x1xf32>
    %16 = vector.shape_cast %15 : vector<1x8x1xf32> to vector<8x1xf32>
    %17 = vector.shape_cast %14 : vector<8x1xf32> to vector<1x8x1xf32>
    tpu.vector_store %arg5[%c0_11, %c0_12, %c0_13], %17 {strides = array<i32>} : memref<1x8x1xf32, #tpu.memory_space<vmem>>, vector<1x8x1xf32>,
    %c0_14 = arith.constant 0 : index
    %c0_15 = arith.constant 0 : index
    %c0_16 = arith.constant 0 : index
    %18 = vector.load %arg6[%c0_14, %c0_15, %c0_16] : memref<1x8x1xf32, #tpu.memory_space<vmem>>, vector<1x8x1xf32>
    %19 = vector.shape_cast %18 : vector<1x8x1xf32> to vector<8x1xf32>
    %20 = arith.mulf %6, %6 : vector<8x256xf32>
    %cst_17 = arith.constant dense<0.000000e+00> : vector<8xf32>
    %21 = vector.multi_reduction <add>, %20, %cst_17 [1] : vector<8x256xf32> to vector<8xf32>
    %22 = vector.shape_cast %21 : vector<8xf32> to vector<8x1xf32>
    %23 = arith.addf %19, %22 : vector<8x1xf32>
    %c0_18 = arith.constant 0 : index
    %c0_19 = arith.constant 0 : index
    %c0_20 = arith.constant 0 : index
    %24 = vector.load %arg6[%c0_18, %c0_19, %c0_20] : memref<1x8x1xf32, #tpu.memory_space<vmem>>, vector<1x8x1xf32>
    %25 = vector.shape_cast %24 : vector<1x8x1xf32> to vector<8x1xf32>
    %26 = vector.shape_cast %23 : vector<8x1xf32> to vector<1x8x1xf32>
    tpu.vector_store %arg6[%c0_18, %c0_19, %c0_20], %26 {strides = array<i32>} : memref<1x8x1xf32, #tpu.memory_space<vmem>>, vector<1x8x1xf32>,
    return
  }
  func.func @transform_0(%arg0: i32, %arg1: i32) -> (i32, i32, i32) {
    %c0_i32 = arith.constant 0 : i32
    %c0_i32_0 = arith.constant 0 : i32
    return %arg0, %c0_i32, %arg1 : i32, i32, i32
  }
  func.func @transform_1(%arg0: i32, %arg1: i32) -> (i32, i32) {
    %c0_i32 = arith.constant 0 : i32
    %c0_i32_0 = arith.constant 0 : i32
    %c0_i32_1 = arith.constant 0 : i32
    return %c0_i32, %c0_i32_0 : i32, i32
  }
  func.func @transform_2(%arg0: i32, %arg1: i32) -> (i32, i32) {
    %c0_i32 = arith.constant 0 : i32
    %c0_i32_0 = arith.constant 0 : i32
    %c0_i32_1 = arith.constant 0 : i32
    return %c0_i32, %c0_i32_0 : i32, i32
  }
  func.func @transform_3(%arg0: i32, %arg1: i32) -> (i32, i32, i32) {
    %c0_i32 = arith.constant 0 : i32
    %c0_i32_0 = arith.constant 0 : i32
    %c0_i32_1 = arith.constant 0 : i32
    return %arg0, %c0_i32, %c0_i32_0 : i32, i32, i32
  }
  func.func @transform_4(%arg0: i32, %arg1: i32) -> (i32, i32, i32) {
    %c0_i32 = arith.constant 0 : i32
    %c0_i32_0 = arith.constant 0 : i32
    %c0_i32_1 = arith.constant 0 : i32
    return %arg0, %c0_i32, %c0_i32_0 : i32, i32, i32
  }
}

module attributes {stable_mosaic.version = 11 : i64} {
  func.func @_fused_conv_bn_relu_kernel(%arg0: i32, %arg1: i32, %arg2: memref<1x4x256xf32, #tpu.memory_space<vmem>>, %arg3: memref<8x4xf32, #tpu.memory_space<vmem>>, %arg4: memref<8x1xf32, #tpu.memory_space<vmem>>, %arg5: memref<1x8x256xf32, #tpu.memory_space<vmem>>) attributes {dimension_semantics = [#tpu.dimension_semantics<parallel>, #tpu.dimension_semantics<parallel>], iteration_bounds = array<i64: 2, 1>, scalar_prefetch = 0 : i64, scratch_operands = 0 : i64, tpu.core_type = #tpu.core_type<tc>, window_params = [{transform_indices = @transform_0, window_bounds = array<i64: 1, 4, 256>}, {pipeline_mode = #tpu.pipeline_mode<synchronous>, transform_indices = @transform_1, window_bounds = array<i64: 8, 4>}, {pipeline_mode = #tpu.pipeline_mode<synchronous>, transform_indices = @transform_2, window_bounds = array<i64: 8, 1>}, {transform_indices = @transform_3, window_bounds = array<i64: 1, 8, 256>}]} {
    %c0 = arith.constant 0 : index
    %c0_0 = arith.constant 0 : index
    %0 = vector.load %arg3[%c0, %c0_0] : memref<8x4xf32, #tpu.memory_space<vmem>>, vector<8x4xf32>
    %c0_1 = arith.constant 0 : index
    %c0_2 = arith.constant 0 : index
    %c0_3 = arith.constant 0 : index
    %1 = vector.load %arg2[%c0_1, %c0_2, %c0_3] : memref<1x4x256xf32, #tpu.memory_space<vmem>>, vector<1x4x256xf32>
    %2 = vector.shape_cast %1 : vector<1x4x256xf32> to vector<4x256xf32>
    %cst = arith.constant dense<0.000000e+00> : vector<8x256xf32>
    %3 = tpu.matmul %0, %2, %cst {dimension_numbers = #tpu.dot_dimension_numbers<[1], [0], [0], [1], [0, 0, 1, 1], [], []>} : vector<8x4xf32>, vector<4x256xf32>, vector<8x256xf32> -> vector<8x256xf32>
    %c0_4 = arith.constant 0 : index
    %c0_5 = arith.constant 0 : index
    %4 = vector.load %arg4[%c0_4, %c0_5] : memref<8x1xf32, #tpu.memory_space<vmem>>, vector<8x1xf32>
    %5 = vector.broadcast %4 : vector<8x1xf32> to vector<8x256xf32>
    %6 = arith.addf %3, %5 : vector<8x256xf32>
    %cst_6 = arith.constant 0.000000e+00 : f32
    %7 = vector.broadcast %cst_6 : f32 to vector<8x256xf32>
    %8 = arith.maximumf %6, %7 : vector<8x256xf32>
    %c0_7 = arith.constant 0 : index
    %c0_8 = arith.constant 0 : index
    %c0_9 = arith.constant 0 : index
    %9 = vector.load %arg5[%c0_7, %c0_8, %c0_9] : memref<1x8x256xf32, #tpu.memory_space<vmem>>, vector<1x8x256xf32>
    %10 = vector.shape_cast %9 : vector<1x8x256xf32> to vector<8x256xf32>
    %11 = vector.shape_cast %8 : vector<8x256xf32> to vector<1x8x256xf32>
    tpu.vector_store %arg5[%c0_7, %c0_8, %c0_9], %11 {strides = array<i32>} : memref<1x8x256xf32, #tpu.memory_space<vmem>>, vector<1x8x256xf32>,
    return
  }
  func.func @transform_0(%arg0: i32, %arg1: i32) -> (i32, i32, i32) {
    %c0_i32 = arith.constant 0 : i32
    %c0_i32_0 = arith.constant 0 : i32
    return %arg0, %c0_i32, %arg1 : i32, i32, i32
  }
  func.func @transform_1(%arg0: i32, %arg1: i32) -> (i32, i32) {
    %c0_i32 = arith.constant 0 : i32
    %c0_i32_0 = arith.constant 0 : i32
    %c0_i32_1 = arith.constant 0 : i32
    return %c0_i32, %c0_i32_0 : i32, i32
  }
  func.func @transform_2(%arg0: i32, %arg1: i32) -> (i32, i32) {
    %c0_i32 = arith.constant 0 : i32
    %c0_i32_0 = arith.constant 0 : i32
    %c0_i32_1 = arith.constant 0 : i32
    return %c0_i32, %c0_i32_0 : i32, i32
  }
  func.func @transform_3(%arg0: i32, %arg1: i32) -> (i32, i32, i32) {
    %c0_i32 = arith.constant 0 : i32
    %c0_i32_0 = arith.constant 0 : i32
    return %arg0, %c0_i32, %arg1 : i32, i32, i32
  }
}

</mosaic_0001>

<llo_original>
// kernel: feature_adapter_forward.2
$region0: #{feature_adapter_forward.2}
  #allocation0 [shape = 'u32[]', space=smem, size = 0x4, offset = 0x4, fixed_abs, tag = 'smem constant byte address 0x4 - core index']
  #allocation1 [shape = 'u32[144,128]{1,0:T(1,128)}', space=vmem, size = 0x12000, scoped, tag = 'internal scratch']
  %s0 = inlined_call_operand.vmem [shape: f32[2,4,256], index: 0, kind: input, shape index: {}]
  %s1 = inlined_call_operand.vmem [shape: f32[8,4], index: 1, kind: input, shape index: {}]
  %s2 = inlined_call_operand.vmem [shape: f32[8,1], index: 2, kind: input, shape index: {}]
  %s3 = inlined_call_operand.vmem [shape: f32[2,8,1], index: 3, kind: output, shape index: {0}]
  %s4 = inlined_call_operand.vmem [shape: f32[2,8,1], index: 4, kind: output, shape index: {1}]
  %5 = xla_tuple %s3, %s4
  %s6 = sld [smem:[#allocation0]]
  $region57: #{feature_adapter_forward.2} parent=0
    _
  %s8 = ssub.s32 1, %s6
  %s9 = scalar_select 0, %s8, %s6
  loop: start=0, step=1, limit=4
  $region2: #{feature_adapter_forward.2} parent=0 // loop_pre_header
    _
  $region3: #{feature_adapter_forward.2} parent=0 // loop_header
    %s11 = sphi 0, %s15
    %p12 = scmp.ge.s32.totalorder %s11, 4
    %s18 = sphi 0, %s30
    %s19 = sphi 0, %s26
    %s20 = sphi 0, %s18
    %s21 = sphi 0, %s19
    %s22 = sphi 0, %s20
    %s23 = sphi 0, %s21
    %s35 = sphi 0, %s37
    %s38 = sphi 0, %s35
    %s39 = sphi 0, %s38
    %s55 = sphi 0, %s39
    %s59 = sphi 0, %s59
    %s61 = sphi 0, %s59
    %s62 = sphi 0, %s61
    %s76 = sphi 0, %s62
    %s80 = sphi 0, %s80
    %s82 = sphi 0, %s80
    %s83 = sphi 0, %s82
    %s97 = sphi 0, %s83
    %s103 = sphi 0, %s105
    %s106 = sphi 0, %s103
    %s107 = sphi 0, %s106
    %s123 = sphi 0, %s107
    %s129 = sphi 0, %s131
    %s132 = sphi 0, %s129
    %s133 = sphi 0, %s132
    %s149 = sphi 0, %s133
  $region4: #{feature_adapter_forward.2} parent=0 // loop_header_branch
    %14 = sbr.rel (%p12) target = $region8
  $region5: #{feature_adapter_forward.2} parent=0 // loop_body
    %s16 = ssub.s32 %s11, 1
    %s17 = ssub.s32 %s11, 2
    %s24 = sadd.s32 1, %s19
    %p25 = scmp.ge.s32.totalorder %s24, 1
    %s26 = scalar_select %p25, 0, %s24
    %s27 = sadd.s32 1, %s18
    %s28 = scalar_select %p25, %s27, %s18
    %p29 = scmp.ge.s32.totalorder %s28, 2
    %s30 = scalar_select %p29, 0, %s28
    %s31 = ssub.s32 %s18, %s30
    %s32 = ssub.s32 %s19, %s26
    %s33 = sor.u32 %s31, %s32
    %p34 = scmp.eq.s32.totalorder %s33, 0
    %s36 = sadd.s32 %s35, 1
    %s37 = scalar_select %p34, %s35, %s36
    %p40 = pneg %p34
    %p41 = scmp.eq.s32.totalorder %s11, 1
    %p42 = por %p40, %p41
    %p43 = scmp.ne.s32.totalorder %s35, %s38
    %p44 = scmp.eq.s32.totalorder %s11, 0
    %p45 = por %p43, %p44
    %p46 = scmp.ne.s32.totalorder %s35, %s38
    %p47 = scmp.eq.s32.totalorder %s16, 1
    %p48 = por %p46, %p47
    %p49 = scmp.ne.s32.totalorder %s38, %s39
    %p50 = scmp.eq.s32.totalorder %s16, 0
    %p51 = por %p49, %p50
    %p52 = scmp.ne.s32.totalorder %s38, %s39
    %p53 = scmp.eq.s32.totalorder %s17, 1
    %p54 = por %p52, %p53
    %p56 = scmp.ne.s32.totalorder %s39, %s55
    %p57 = scmp.eq.s32.totalorder %s17, 0
    %p58 = por %p56, %p57
    %s60 = sadd.s32 %s59, 1
    %p63 = scmp.eq.s32.totalorder %s11, 1
    %p64 = scmp.ne.s32.totalorder %s59, %s61
    %p65 = scmp.eq.s32.totalorder %s11, 0
    %p66 = por %p64, %p65
    %p67 = scmp.ne.s32.totalorder %s59, %s61
    %p68 = scmp.eq.s32.totalorder %s16, 1
    %p69 = por %p67, %p68
    %p70 = scmp.ne.s32.totalorder %s61, %s62
    %p71 = scmp.eq.s32.totalorder %s16, 0
    %p72 = por %p70, %p71
    %p73 = scmp.ne.s32.totalorder %s61, %s62
    %p74 = scmp.eq.s32.totalorder %s17, 1
    %p75 = por %p73, %p74
    %p77 = scmp.ne.s32.totalorder %s62, %s76
    %p78 = scmp.eq.s32.totalorder %s17, 0
    %p79 = por %p77, %p78
    %s81 = sadd.s32 %s80, 1
    %p84 = scmp.eq.s32.totalorder %s11, 1
    %p85 = scmp.ne.s32.totalorder %s80, %s82
    %p86 = scmp.eq.s32.totalorder %s11, 0
    %p87 = por %p85, %p86
    %p88 = scmp.ne.s32.totalorder %s80, %s82
    %p89 = scmp.eq.s32.totalorder %s16, 1
    %p90 = por %p88, %p89
    %p91 = scmp.ne.s32.totalorder %s82, %s83
    %p92 = scmp.eq.s32.totalorder %s16, 0
    %p93 = por %p91, %p92
    %p94 = scmp.ne.s32.totalorder %s82, %s83
    %p95 = scmp.eq.s32.totalorder %s17, 1
    %p96 = por %p94, %p95
    %p98 = scmp.ne.s32.totalorder %s83, %s97
    %p99 = scmp.eq.s32.totalorder %s17, 0
    %p100 = por %p98, %p99
    %s101 = ssub.s32 %s18, %s30
    %p102 = scmp.eq.s32.totalorder %s101, 0
    %s104 = sadd.s32 %s103, 1
    %s105 = scalar_select %p102, %s103, %s104
    %p108 = pneg %p102
    %p109 = scmp.eq.s32.totalorder %s11, 1
    %p110 = por %p108, %p109
    %p111 = scmp.ne.s32.totalorder %s103, %s106
    %p112 = scmp.eq.s32.totalorder %s11, 0
    %p113 = por %p111, %p112
    %p114 = scmp.ne.s32.totalorder %s103, %s106
    %p115 = scmp.eq.s32.totalorder %s16, 1
    %p116 = por %p114, %p115
    %p117 = scmp.ne.s32.totalorder %s106, %s107
    %p118 = scmp.eq.s32.totalorder %s16, 0
    %p119 = por %p117, %p118
    %p120 = scmp.ne.s32.totalorder %s106, %s107
    %p121 = scmp.eq.s32.totalorder %s17, 1
    %p122 = por %p120, %p121
    %p124 = scmp.ne.s32.totalorder %s107, %s123
    %p125 = scmp.eq.s32.totalorder %s17, 0
    %p126 = por %p124, %p125
    %s127 = ssub.s32 %s18, %s30
    %p128 = scmp.eq.s32.totalorder %s127, 0
    %s130 = sadd.s32 %s129, 1
    %s131 = scalar_select %p128, %s129, %s130
    %p134 = pneg %p128
    %p135 = scmp.eq.s32.totalorder %s11, 1
    %p136 = por %p134, %p135
    %p137 = scmp.ne.s32.totalorder %s129, %s132
    %p138 = scmp.eq.s32.totalorder %s11, 0
    %p139 = por %p137, %p138
    %p140 = scmp.ne.s32.totalorder %s129, %s132
    %p141 = scmp.eq.s32.totalorder %s16, 1
    %p142 = por %p140, %p141
    %p143 = scmp.ne.s32.totalorder %s132, %s133
    %p144 = scmp.eq.s32.totalorder %s16, 0
    %p145 = por %p143, %p144
    %p146 = scmp.ne.s32.totalorder %s132, %s133
    %p147 = scmp.eq.s32.totalorder %s17, 1
    %p148 = por %p146, %p147
    %p150 = scmp.ne.s32.totalorder %s133, %s149
    %p151 = scmp.eq.s32.totalorder %s17, 0
    %p152 = por %p150, %p151
    %p153 = scmp.le.s32.totalorder 1, %s11
    %p154 = scmp.lt.s32.totalorder %s11, 3
    %p155 = pnand %p153, %p154
    %p156 = pneg %p155
    // Predicated region
    $region9: #{feature_adapter_forward.2} parent=5 // pred_check
      _
    $region10: #{feature_adapter_forward.2} parent=5 // pred_check_branch
      %158 = sbr.rel (%p155) target = $region12
    $region11: #{feature_adapter_forward.2} parent=5 // pred_region
      %s159 = ssub.s32 %s11, 1
      // Predicated region
      $region13: #{feature_adapter_forward.2} parent=11 // pred_check
        %p160 = pneg %p72
      $region14: #{feature_adapter_forward.2} parent=11 // pred_check_branch
        %162 = sbr.rel (%p160) target = $region16
      $region15: #{feature_adapter_forward.2} parent=11 // pred_region
        _
      $region16: #{feature_adapter_forward.2} parent=11 // pred_fallthru
        _
      // Predicated region
      $region17: #{feature_adapter_forward.2} parent=11 // pred_check
        %p163 = pneg %p93
      $region18: #{feature_adapter_forward.2} parent=11 // pred_check_branch
        %165 = sbr.rel (%p163) target = $region20
      $region19: #{feature_adapter_forward.2} parent=11 // pred_region
        _
      $region20: #{feature_adapter_forward.2} parent=11 // pred_fallthru
        _
    $region12: #{feature_adapter_forward.2} parent=5 // pred_fallthru
      _
    %p166 = scmp.lt.s32.totalorder %s11, 2
    // Predicated region
    $region21: #{feature_adapter_forward.2} parent=5 // pred_check
      %p167 = pneg %p166
    $region22: #{feature_adapter_forward.2} parent=5 // pred_check_branch
      %169 = sbr.rel (%p167) target = $region24
    $region23: #{feature_adapter_forward.2} parent=5 // pred_region
      // Predicated region
      $region25: #{feature_adapter_forward.2} parent=23 // pred_check
        %p170 = pneg %p45
      $region26: #{feature_adapter_forward.2} parent=23 // pred_check_branch
        %172 = sbr.rel (%p170) target = $region28
      $region27: #{feature_adapter_forward.2} parent=23 // pred_region
        %s173 = smul.u32 2, %s19
        %p174 = scmp.lt.s32.totalorder %s18, 1
        %s175 = scalar_select %p174, %s18, 1
        %p176 = scmp.lt.s32.totalorder %s173, 1
        %s177 = scalar_select %p176, %s173, 1
        %s178 = smul.addr %s175, 2
        %s179 = sadd.s32 %s177, %s178
        %s180 = smul.addr %s179, 4
        %s181 = scalar_lea.vmem %s0, %s180
        %s182 = smul.u32 2, %s19
      $region28: #{feature_adapter_forward.2} parent=23 // pred_fallthru
        _
    $region24: #{feature_adapter_forward.2} parent=5 // pred_fallthru
      _
    %p183 = scmp.le.s32.totalorder 1, %s11
    %p184 = scmp.lt.s32.totalorder %s11, 3
    %p185 = pnand %p183, %p184
    %p186 = pneg %p185
    // Predicated region
    $region29: #{feature_adapter_forward.2} parent=5 // pred_check
      _
    $region30: #{feature_adapter_forward.2} parent=5 // pred_check_branch
      %188 = sbr.rel (%p185) target = $region32
    $region31: #{feature_adapter_forward.2} parent=5 // pred_region
      %s189 = ssub.s32 %s11, 1
      %s190 = smul.u32 2, %s21
      %p191 = scmp.lt.s32.totalorder %s20, 1
      %s192 = scalar_select %p191, %s20, 1
      %p193 = scmp.lt.s32.totalorder %s190, 1
      %s194 = scalar_select %p193, %s190, 1
      %s195 = smul.addr %s192, 2
      %s196 = sadd.s32 %s194, %s195
      %s197 = smul.addr %s196, 4
      %s198 = scalar_lea.vmem %s0, %s197
      %p199 = pneg %p51
      %p200 = pneg %p48
      %p201 = pneg %p72
      %p202 = pneg %p69
      %p203 = pneg %p93
      %p204 = pneg %p90
      %p205 = pneg %p119
      %p206 = pneg %p116
      %p207 = scmp.lt.s32.totalorder %s20, 1
      %s208 = scalar_select %p207, %s20, 1
      %s209 = smul.addr %s208, 8
      %s210 = scalar_lea.vmem %s3, %s209
      %p211 = pneg %p145
      %p212 = pneg %p142
      %p213 = scmp.lt.s32.totalorder %s20, 1
      %s214 = scalar_select %p213, %s20, 1
      %s215 = smul.addr %s214, 8
      %s216 = scalar_lea.vmem %s4, %s215
      %s217 = smul.u32 2, %s21
      %p218 = scmp.lt.s32.totalorder %s20, 1
      %s219 = scalar_select %p218, %s20, 1
      %p220 = scmp.lt.s32.totalorder %s217, 1
      %s221 = scalar_select %p220, %s217, 1
      %s222 = smul.addr %s219, 2
      %s223 = sadd.s32 %s221, %s222
      %s224 = smul.addr %s223, 4
      %s225 = scalar_lea.vmem %s0, %s224
      %s226 = smul.u32 2, %s21
      %p227 = scmp.lt.s32.totalorder %s20, 1
      %s228 = scalar_select %p227, %s20, 1
      %s229 = smul.addr %s228, 8
      %s230 = scalar_lea.vmem %s3, %s229
      %p231 = scmp.lt.s32.totalorder %s20, 1
      %s232 = scalar_select %p231, %s20, 1
      %s233 = smul.addr %s232, 8
      %s234 = scalar_lea.vmem %s4, %s233
      %v235 = vld [vmem:[%s1] sm:$0xff]
      %v236 = vld [vmem:[%s225] sm:$0xff]
      %v237 = vld [vmem:[%s2] sm:$0xff]
      %239 = vset.pattern.permute.xlu0 0
      %240 = vperm.xlu0 %239, %v237
      %v241 = vpop.permute.xlu0 %240
      %v244 = vcombine.high %v236, %v236
      %vm245 = vcmask 31744
      %v247 = vsel %vm245, %v235, 0
      %vm249 = vcmask 1043456
      %v250 = vsel %vm249, %v236, 0
      %v252 = vsel %vm249, %v244, 0
      %254 = vmatprep.subr.mxu0 0.0
      %255 = vmatpush1.msra.mxu0 0.0
      %256 = vmatprep.subr.mxu0 0.0
      %257 = vmatpush1.msra.mxu0 0.0
      %258 = vmatprep.subr.mxu0 0.0
      %259 = vmatpush1.msra.mxu0 0.0
      %260 = vmatprep.subr.mxu0 0.0
      %261 = vmatpush1.msra.mxu0 0.0
      %262 = vmatprep.subr.mxu0 0.0
      %263 = vmatpush1.msra.mxu0 0.0
      %264 = vmatprep.subr.mxu0 0.0
      %265 = vmatpush1.msra.mxu0 0.0
      %266 = vmatprep.subr.mxu0 0.0
      %267 = vmatpush1.msra.mxu0 0.0
      %268 = vmatprep.subr.mxu0 0.0
      %269 = vmatpush1.msra.mxu0 0.0
      %270 = vmatprep.subr.mxu0 0.0
      %271 = vmatpush1.msra.mxu0 0.0
      %272 = vmatprep.subr.mxu0 0.0
      %273 = vmatpush1.msra.mxu0 0.0
      %274 = vmatprep.subr.mxu0 0.0
      %275 = vmatpush1.msra.mxu0 0.0
      %276 = vmatprep.subr.mxu0 0.0
      %277 = vmatpush1.msra.mxu0 0.0
      %278 = vmatprep.subr.mxu0 0.0
      %279 = vmatpush1.msra.mxu0 0.0
      %280 = vmatprep.subr.mxu0 0.0
      %281 = vmatpush1.msra.mxu0 0.0
      %282 = vmatprep.subr.mxu0 0.0
      %283 = vmatpush1.msra.mxu0 0.0
      %284 = vmatprep.subr.mxu0 %v252
      %285 = vmatpush1.msra.mxu0 %v250
      %286 = vmatprep.subr.mxu0 0.0
      %287 = vmatpush2.msra.mxu0 0.0
      %288 = vmatprep.subr.mxu0 0.0
      %289 = vmatpush2.msra.mxu0 0.0
      %290 = vmatprep.subr.mxu0 0.0
      %291 = vmatpush2.msra.mxu0 0.0
      %292 = vmatprep.subr.mxu0 0.0
      %293 = vmatpush2.msra.mxu0 0.0
      %294 = vmatprep.subr.mxu0 0.0
      %295 = vmatpush2.msra.mxu0 0.0
      %296 = vmatprep.subr.mxu0 0.0
      %297 = vmatpush2.msra.mxu0 0.0
      %298 = vmatprep.subr.mxu0 0.0
      %299 = vmatpush2.msra.mxu0 0.0
      %300 = vmatprep.subr.mxu0 0.0
      %301 = vmatpush2.msra.mxu0 0.0
      %302 = vmatprep.subr.mxu0 0.0
      %303 = vmatpush2.msra.mxu0 0.0
      %304 = vmatprep.subr.mxu0 0.0
      %305 = vmatpush2.msra.mxu0 0.0
      %306 = vmatprep.subr.mxu0 0.0
      %307 = vmatpush2.msra.mxu0 0.0
      %308 = vmatprep.subr.mxu0 0.0
      %309 = vmatpush2.msra.mxu0 0.0
      %310 = vmatprep.subr.mxu0 0.0
      %311 = vmatpush2.msra.mxu0 0.0
      %312 = vmatprep.subr.mxu0 0.0
      %313 = vmatpush2.msra.mxu0 0.0
      %314 = vmatprep.subr.mxu0 0.0
      %315 = vmatpush2.msra.mxu0 0.0
      %316 = vmatprep.subr.mxu0 0.0
      %317 = vmatpush2.msra.mxu0 0.0
      %318 = vmatprep.mubr.f32.mxu0 0.0
      %319 = vmatmul.mubr.f32.gmra.mxu0 %v247
      %v320 = vpop.f32.mrf.mxu0
      %v321 = vadd.f32 %v241, %v320
      %v322 = vpop.f32.mrf.mxu0
      %v323 = vadd.f32 %v241, %v322
      %324 = vdwg.mxu0
      %p325 = scmp.eq.s32.totalorder %s21, 0
      // Predicated region
      $region33: #{feature_adapter_forward.2} parent=31 // pred_check
        %p326 = pneg %p325
      $region34: #{feature_adapter_forward.2} parent=31 // pred_check_branch
        %328 = sbr.rel (%p326) target = $region36
      $region35: #{feature_adapter_forward.2} parent=31 // pred_region
        %vm329 = vcmask 7168
        %330 = vst.msk [vmem:[%s230] sm:$0xff] %vm329, 0.0
        %331 = vst.msk [vmem:[%s234] sm:$0xff] %vm329, 0.0
      $region36: #{feature_adapter_forward.2} parent=31 // pred_fallthru
        _
      %v332 = vld [vmem:[%s230] sm:$0xff]
      %v333 = vadd.f32 %v321, %v323
      %334 = vadd.xlane.f32.xlu0 %v333
      %v335 = vpop.xlane.xlu0 %334
      %v336 = vadd.f32 %v332, %v335
      %vm337 = vcmask 7168
      %338 = vst.msk [vmem:[%s230] sm:$0xff] %vm337, %v336
      %v339 = vld [vmem:[%s234] sm:$0xff]
      %v340 = vmul.f32 %v321, %v321
      %v341 = vmul.f32 %v323, %v323
      %v342 = vadd.f32 %v340, %v341
      %343 = vadd.xlane.f32.xlu0 %v342
      %v344 = vpop.xlane.xlu0 %343
      %v345 = vadd.f32 %v339, %v344
      %346 = vst.msk [vmem:[%s234] sm:$0xff] %vm337, %v345
      %p347 = scmp.lt.s32.totalorder %s20, 1
      %s348 = scalar_select %p347, %s20, 1
      %s349 = smul.addr %s348, 8
      %s350 = scalar_lea.vmem %s3, %s349
      %p351 = scmp.lt.s32.totalorder %s20, 1
      %s352 = scalar_select %p351, %s20, 1
      %s353 = smul.addr %s352, 8
      %s354 = scalar_lea.vmem %s4, %s353
      // Predicated region
      $region37: #{feature_adapter_forward.2} parent=31 // pred_check
        %p355 = pneg %p116
      $region38: #{feature_adapter_forward.2} parent=31 // pred_check_branch
        %357 = sbr.rel (%p355) target = $region40
      $region39: #{feature_adapter_forward.2} parent=31 // pred_region
        _
      $region40: #{feature_adapter_forward.2} parent=31 // pred_fallthru
        _
      // Predicated region
      $region41: #{feature_adapter_forward.2} parent=31 // pred_check
        %p358 = pneg %p142
      $region42: #{feature_adapter_forward.2} parent=31 // pred_check_branch
        %360 = sbr.rel (%p358) target = $region44
      $region43: #{feature_adapter_forward.2} parent=31 // pred_region
        _
      $region44: #{feature_adapter_forward.2} parent=31 // pred_fallthru
        _
    $region32: #{feature_adapter_forward.2} parent=5 // pred_fallthru
      _
    %p361 = scmp.le.s32.totalorder 2, %s11
    // Predicated region
    $region45: #{feature_adapter_forward.2} parent=5 // pred_check
      %p362 = pneg %p361
    $region46: #{feature_adapter_forward.2} parent=5 // pred_check_branch
      %364 = sbr.rel (%p362) target = $region48
    $region47: #{feature_adapter_forward.2} parent=5 // pred_region
      %s365 = ssub.s32 %s11, 2
      // Predicated region
      $region49: #{feature_adapter_forward.2} parent=47 // pred_check
        %p366 = pneg %p122
      $region50: #{feature_adapter_forward.2} parent=47 // pred_check_branch
        %368 = sbr.rel (%p366) target = $region52
      $region51: #{feature_adapter_forward.2} parent=47 // pred_region
        %p369 = scmp.lt.s32.totalorder %s22, 1
        %s370 = scalar_select %p369, %s22, 1
        %s371 = smul.addr %s370, 8
        %s372 = scalar_lea.vmem %s3, %s371
      $region52: #{feature_adapter_forward.2} parent=47 // pred_fallthru
        _
      // Predicated region
      $region53: #{feature_adapter_forward.2} parent=47 // pred_check
        %p373 = pneg %p148
      $region54: #{feature_adapter_forward.2} parent=47 // pred_check_branch
        %375 = sbr.rel (%p373) target = $region56
      $region55: #{feature_adapter_forward.2} parent=47 // pred_region
        %p376 = scmp.lt.s32.totalorder %s22, 1
        %s377 = scalar_select %p376, %s22, 1
        %s378 = smul.addr %s377, 8
        %s379 = scalar_lea.vmem %s4, %s378
      $region56: #{feature_adapter_forward.2} parent=47 // pred_fallthru
        _
    $region48: #{feature_adapter_forward.2} parent=5 // pred_fallthru
      _
  $region6: #{feature_adapter_forward.2} parent=0 // loop_footer
    %s15 = sadd.s32 1, %s11
  $region7: #{feature_adapter_forward.2} parent=0 // loop_footer_branch
    %10 = sbr.rel target = $region3
  $region8: #{feature_adapter_forward.2} parent=0 // loop_exit
    _

// kernel: feature_adapter_forward.3
$region0: #{feature_adapter_forward.3}
  #allocation0 [shape = 'u32[]', space=smem, size = 0x4, offset = 0x4, fixed_abs, tag = 'smem constant byte address 0x4 - core index']
  #allocation1 [shape = 'u32[144,128]{1,0:T(1,128)}', space=vmem, size = 0x12000, scoped, tag = 'internal scratch']
  %s0 = inlined_call_operand.vmem [shape: f32[2,4,256], index: 0, kind: input, shape index: {}]
  %s1 = inlined_call_operand.vmem [shape: f32[8,4], index: 1, kind: input, shape index: {}]
  %s2 = inlined_call_operand.vmem [shape: f32[8,1], index: 2, kind: input, shape index: {}]
  %s3 = inlined_call_operand.vmem [shape: f32[2,8,256], index: 3, kind: output, shape index: {}]
  %s4 = sld [smem:[#allocation0]]
  $region45: #{feature_adapter_forward.3} parent=0
    _
  %s6 = ssub.s32 1, %s4
  %s7 = scalar_select 0, %s6, %s4
  loop: start=0, step=1, limit=4
  $region2: #{feature_adapter_forward.3} parent=0 // loop_pre_header
    _
  $region3: #{feature_adapter_forward.3} parent=0 // loop_header
    %s9 = sphi 0, %s13
    %p10 = scmp.ge.s32.totalorder %s9, 4
    %s16 = sphi 0, %s28
    %s17 = sphi 0, %s24
    %s18 = sphi 0, %s16
    %s19 = sphi 0, %s17
    %s20 = sphi 0, %s18
    %s21 = sphi 0, %s19
    %s33 = sphi 0, %s35
    %s36 = sphi 0, %s33
    %s37 = sphi 0, %s36
    %s53 = sphi 0, %s37
    %s57 = sphi 0, %s57
    %s59 = sphi 0, %s57
    %s60 = sphi 0, %s59
    %s74 = sphi 0, %s60
    %s78 = sphi 0, %s78
    %s80 = sphi 0, %s78
    %s81 = sphi 0, %s80
    %s95 = sphi 0, %s81
    %s103 = sphi 0, %s105
    %s106 = sphi 0, %s103
    %s107 = sphi 0, %s106
    %s123 = sphi 0, %s107
  $region4: #{feature_adapter_forward.3} parent=0 // loop_header_branch
    %12 = sbr.rel (%p10) target = $region8
  $region5: #{feature_adapter_forward.3} parent=0 // loop_body
    %s14 = ssub.s32 %s9, 1
    %s15 = ssub.s32 %s9, 2
    %s22 = sadd.s32 1, %s17
    %p23 = scmp.ge.s32.totalorder %s22, 1
    %s24 = scalar_select %p23, 0, %s22
    %s25 = sadd.s32 1, %s16
    %s26 = scalar_select %p23, %s25, %s16
    %p27 = scmp.ge.s32.totalorder %s26, 2
    %s28 = scalar_select %p27, 0, %s26
    %s29 = ssub.s32 %s16, %s28
    %s30 = ssub.s32 %s17, %s24
    %s31 = sor.u32 %s29, %s30
    %p32 = scmp.eq.s32.totalorder %s31, 0
    %s34 = sadd.s32 %s33, 1
    %s35 = scalar_select %p32, %s33, %s34
    %p38 = pneg %p32
    %p39 = scmp.eq.s32.totalorder %s9, 1
    %p40 = por %p38, %p39
    %p41 = scmp.ne.s32.totalorder %s33, %s36
    %p42 = scmp.eq.s32.totalorder %s9, 0
    %p43 = por %p41, %p42
    %p44 = scmp.ne.s32.totalorder %s33, %s36
    %p45 = scmp.eq.s32.totalorder %s14, 1
    %p46 = por %p44, %p45
    %p47 = scmp.ne.s32.totalorder %s36, %s37
    %p48 = scmp.eq.s32.totalorder %s14, 0
    %p49 = por %p47, %p48
    %p50 = scmp.ne.s32.totalorder %s36, %s37
    %p51 = scmp.eq.s32.totalorder %s15, 1
    %p52 = por %p50, %p51
    %p54 = scmp.ne.s32.totalorder %s37, %s53
    %p55 = scmp.eq.s32.totalorder %s15, 0
    %p56 = por %p54, %p55
    %s58 = sadd.s32 %s57, 1
    %p61 = scmp.eq.s32.totalorder %s9, 1
    %p62 = scmp.ne.s32.totalorder %s57, %s59
    %p63 = scmp.eq.s32.totalorder %s9, 0
    %p64 = por %p62, %p63
    %p65 = scmp.ne.s32.totalorder %s57, %s59
    %p66 = scmp.eq.s32.totalorder %s14, 1
    %p67 = por %p65, %p66
    %p68 = scmp.ne.s32.totalorder %s59, %s60
    %p69 = scmp.eq.s32.totalorder %s14, 0
    %p70 = por %p68, %p69
    %p71 = scmp.ne.s32.totalorder %s59, %s60
    %p72 = scmp.eq.s32.totalorder %s15, 1
    %p73 = por %p71, %p72
    %p75 = scmp.ne.s32.totalorder %s60, %s74
    %p76 = scmp.eq.s32.totalorder %s15, 0
    %p77 = por %p75, %p76
    %s79 = sadd.s32 %s78, 1
    %p82 = scmp.eq.s32.totalorder %s9, 1
    %p83 = scmp.ne.s32.totalorder %s78, %s80
    %p84 = scmp.eq.s32.totalorder %s9, 0
    %p85 = por %p83, %p84
    %p86 = scmp.ne.s32.totalorder %s78, %s80
    %p87 = scmp.eq.s32.totalorder %s14, 1
    %p88 = por %p86, %p87
    %p89 = scmp.ne.s32.totalorder %s80, %s81
    %p90 = scmp.eq.s32.totalorder %s14, 0
    %p91 = por %p89, %p90
    %p92 = scmp.ne.s32.totalorder %s80, %s81
    %p93 = scmp.eq.s32.totalorder %s15, 1
    %p94 = por %p92, %p93
    %p96 = scmp.ne.s32.totalorder %s81, %s95
    %p97 = scmp.eq.s32.totalorder %s15, 0
    %p98 = por %p96, %p97
    %s99 = ssub.s32 %s16, %s28
    %s100 = ssub.s32 %s17, %s24
    %s101 = sor.u32 %s99, %s100
    %p102 = scmp.eq.s32.totalorder %s101, 0
    %s104 = sadd.s32 %s103, 1
    %s105 = scalar_select %p102, %s103, %s104
    %p108 = pneg %p102
    %p109 = scmp.eq.s32.totalorder %s9, 1
    %p110 = por %p108, %p109
    %p111 = scmp.ne.s32.totalorder %s103, %s106
    %p112 = scmp.eq.s32.totalorder %s9, 0
    %p113 = por %p111, %p112
    %p114 = scmp.ne.s32.totalorder %s103, %s106
    %p115 = scmp.eq.s32.totalorder %s14, 1
    %p116 = por %p114, %p115
    %p117 = scmp.ne.s32.totalorder %s106, %s107
    %p118 = scmp.eq.s32.totalorder %s14, 0
    %p119 = por %p117, %p118
    %p120 = scmp.ne.s32.totalorder %s106, %s107
    %p121 = scmp.eq.s32.totalorder %s15, 1
    %p122 = por %p120, %p121
    %p124 = scmp.ne.s32.totalorder %s107, %s123
    %p125 = scmp.eq.s32.totalorder %s15, 0
    %p126 = por %p124, %p125
    %p127 = scmp.le.s32.totalorder 1, %s9
    %p128 = scmp.lt.s32.totalorder %s9, 3
    %p129 = pnand %p127, %p128
    %p130 = pneg %p129
    // Predicated region
    $region9: #{feature_adapter_forward.3} parent=5 // pred_check
      _
    $region10: #{feature_adapter_forward.3} parent=5 // pred_check_branch
      %132 = sbr.rel (%p129) target = $region12
    $region11: #{feature_adapter_forward.3} parent=5 // pred_region
      %s133 = ssub.s32 %s9, 1
      // Predicated region
      $region13: #{feature_adapter_forward.3} parent=11 // pred_check
        %p134 = pneg %p70
      $region14: #{feature_adapter_forward.3} parent=11 // pred_check_branch
        %136 = sbr.rel (%p134) target = $region16
      $region15: #{feature_adapter_forward.3} parent=11 // pred_region
        _
      $region16: #{feature_adapter_forward.3} parent=11 // pred_fallthru
        _
      // Predicated region
      $region17: #{feature_adapter_forward.3} parent=11 // pred_check
        %p137 = pneg %p91
      $region18: #{feature_adapter_forward.3} parent=11 // pred_check_branch
        %139 = sbr.rel (%p137) target = $region20
      $region19: #{feature_adapter_forward.3} parent=11 // pred_region
        _
      $region20: #{feature_adapter_forward.3} parent=11 // pred_fallthru
        _
    $region12: #{feature_adapter_forward.3} parent=5 // pred_fallthru
      _
    %p140 = scmp.lt.s32.totalorder %s9, 2
    // Predicated region
    $region21: #{feature_adapter_forward.3} parent=5 // pred_check
      %p141 = pneg %p140
    $region22: #{feature_adapter_forward.3} parent=5 // pred_check_branch
      %143 = sbr.rel (%p141) target = $region24
    $region23: #{feature_adapter_forward.3} parent=5 // pred_region
      // Predicated region
      $region25: #{feature_adapter_forward.3} parent=23 // pred_check
        %p144 = pneg %p43
      $region26: #{feature_adapter_forward.3} parent=23 // pred_check_branch
        %146 = sbr.rel (%p144) target = $region28
      $region27: #{feature_adapter_forward.3} parent=23 // pred_region
        %s147 = smul.u32 2, %s17
        %p148 = scmp.lt.s32.totalorder %s16, 1
        %s149 = scalar_select %p148, %s16, 1
        %p150 = scmp.lt.s32.totalorder %s147, 1
        %s151 = scalar_select %p150, %s147, 1
        %s152 = smul.addr %s149, 2
        %s153 = sadd.s32 %s151, %s152
        %s154 = smul.addr %s153, 4
        %s155 = scalar_lea.vmem %s0, %s154
        %s156 = smul.u32 2, %s17
      $region28: #{feature_adapter_forward.3} parent=23 // pred_fallthru
        _
    $region24: #{feature_adapter_forward.3} parent=5 // pred_fallthru
      _
    %p157 = scmp.le.s32.totalorder 1, %s9
    %p158 = scmp.lt.s32.totalorder %s9, 3
    %p159 = pnand %p157, %p158
    %p160 = pneg %p159
    // Predicated region
    $region29: #{feature_adapter_forward.3} parent=5 // pred_check
      _
    $region30: #{feature_adapter_forward.3} parent=5 // pred_check_branch
      %162 = sbr.rel (%p159) target = $region32
    $region31: #{feature_adapter_forward.3} parent=5 // pred_region
      %s163 = ssub.s32 %s9, 1
      %s164 = smul.u32 2, %s19
      %p165 = scmp.lt.s32.totalorder %s18, 1
      %s166 = scalar_select %p165, %s18, 1
      %p167 = scmp.lt.s32.totalorder %s164, 1
      %s168 = scalar_select %p167, %s164, 1
      %s169 = smul.addr %s166, 2
      %s170 = sadd.s32 %s168, %s169
      %s171 = smul.addr %s170, 4
      %s172 = scalar_lea.vmem %s0, %s171
      %p173 = pneg %p49
      %p174 = pneg %p46
      %p175 = pneg %p70
      %p176 = pneg %p67
      %p177 = pneg %p91
      %p178 = pneg %p88
      %p179 = pneg %p119
      %p180 = pneg %p116
      %s181 = smul.u32 2, %s19
      %p182 = scmp.lt.s32.totalorder %s18, 1
      %s183 = scalar_select %p182, %s18, 1
      %p184 = scmp.lt.s32.totalorder %s181, 1
      %s185 = scalar_select %p184, %s181, 1
      %s186 = smul.addr %s183, 2
      %s187 = sadd.s32 %s185, %s186
      %s188 = smul.addr %s187, 8
      %s189 = scalar_lea.vmem %s3, %s188
      %s190 = smul.u32 2, %s19
      %p191 = scmp.lt.s32.totalorder %s18, 1
      %s192 = scalar_select %p191, %s18, 1
      %p193 = scmp.lt.s32.totalorder %s190, 1
      %s194 = scalar_select %p193, %s190, 1
      %s195 = smul.addr %s192, 2
      %s196 = sadd.s32 %s194, %s195
      %s197 = smul.addr %s196, 4
      %s198 = scalar_lea.vmem %s0, %s197
      %s199 = smul.u32 2, %s19
      %s200 = smul.u32 2, %s19
      %p201 = scmp.lt.s32.totalorder %s18, 1
      %s202 = scalar_select %p201, %s18, 1
      %p203 = scmp.lt.s32.totalorder %s200, 1
      %s204 = scalar_select %p203, %s200, 1
      %s205 = smul.addr %s202, 2
      %s206 = sadd.s32 %s204, %s205
      %s207 = smul.addr %s206, 8
      %s208 = scalar_lea.vmem %s3, %s207
      %s209 = smul.u32 2, %s19
      %v210 = vld [vmem:[%s1] sm:$0xff]
      %v211 = vld [vmem:[%s198] sm:$0xff]
      %v212 = vld [vmem:[%s2] sm:$0xff]
      %214 = vset.pattern.permute.xlu0 0
      %215 = vperm.xlu0 %214, %v212
      %v216 = vpop.permute.xlu0 %215
      %v219 = vcombine.high %v211, %v211
      %vm220 = vcmask 31744
      %v222 = vsel %vm220, %v210, 0
      %vm224 = vcmask 1043456
      %v225 = vsel %vm224, %v211, 0
      %v227 = vsel %vm224, %v219, 0
      %229 = vmatprep.subr.mxu0 0.0
      %230 = vmatpush1.msra.mxu0 0.0
      %231 = vmatprep.subr.mxu0 0.0
      %232 = vmatpush1.msra.mxu0 0.0
      %233 = vmatprep.subr.mxu0 0.0
      %234 = vmatpush1.msra.mxu0 0.0
      %235 = vmatprep.subr.mxu0 0.0
      %236 = vmatpush1.msra.mxu0 0.0
      %237 = vmatprep.subr.mxu0 0.0
      %238 = vmatpush1.msra.mxu0 0.0
      %239 = vmatprep.subr.mxu0 0.0
      %240 = vmatpush1.msra.mxu0 0.0
      %241 = vmatprep.subr.mxu0 0.0
      %242 = vmatpush1.msra.mxu0 0.0
      %243 = vmatprep.subr.mxu0 0.0
      %244 = vmatpush1.msra.mxu0 0.0
      %245 = vmatprep.subr.mxu0 0.0
      %246 = vmatpush1.msra.mxu0 0.0
      %247 = vmatprep.subr.mxu0 0.0
      %248 = vmatpush1.msra.mxu0 0.0
      %249 = vmatprep.subr.mxu0 0.0
      %250 = vmatpush1.msra.mxu0 0.0
      %251 = vmatprep.subr.mxu0 0.0
      %252 = vmatpush1.msra.mxu0 0.0
      %253 = vmatprep.subr.mxu0 0.0
      %254 = vmatpush1.msra.mxu0 0.0
      %255 = vmatprep.subr.mxu0 0.0
      %256 = vmatpush1.msra.mxu0 0.0
      %257 = vmatprep.subr.mxu0 0.0
      %258 = vmatpush1.msra.mxu0 0.0
      %259 = vmatprep.subr.mxu0 %v227
      %260 = vmatpush1.msra.mxu0 %v225
      %261 = vmatprep.subr.mxu0 0.0
      %262 = vmatpush2.msra.mxu0 0.0
      %263 = vmatprep.subr.mxu0 0.0
      %264 = vmatpush2.msra.mxu0 0.0
      %265 = vmatprep.subr.mxu0 0.0
      %266 = vmatpush2.msra.mxu0 0.0
      %267 = vmatprep.subr.mxu0 0.0
      %268 = vmatpush2.msra.mxu0 0.0
      %269 = vmatprep.subr.mxu0 0.0
      %270 = vmatpush2.msra.mxu0 0.0
      %271 = vmatprep.subr.mxu0 0.0
      %272 = vmatpush2.msra.mxu0 0.0
      %273 = vmatprep.subr.mxu0 0.0
      %274 = vmatpush2.msra.mxu0 0.0
      %275 = vmatprep.subr.mxu0 0.0
      %276 = vmatpush2.msra.mxu0 0.0
      %277 = vmatprep.subr.mxu0 0.0
      %278 = vmatpush2.msra.mxu0 0.0
      %279 = vmatprep.subr.mxu0 0.0
      %280 = vmatpush2.msra.mxu0 0.0
      %281 = vmatprep.subr.mxu0 0.0
      %282 = vmatpush2.msra.mxu0 0.0
      %283 = vmatprep.subr.mxu0 0.0
      %284 = vmatpush2.msra.mxu0 0.0
      %285 = vmatprep.subr.mxu0 0.0
      %286 = vmatpush2.msra.mxu0 0.0
      %287 = vmatprep.subr.mxu0 0.0
      %288 = vmatpush2.msra.mxu0 0.0
      %289 = vmatprep.subr.mxu0 0.0
      %290 = vmatpush2.msra.mxu0 0.0
      %291 = vmatprep.subr.mxu0 0.0
      %292 = vmatpush2.msra.mxu0 0.0
      %293 = vmatprep.mubr.f32.mxu0 0.0
      %294 = vmatmul.mubr.f32.gmra.mxu0 %v222
      %v295 = vpop.f32.mrf.mxu0
      %v296 = vadd.f32 %v216, %v295
      %v297 = vpop.f32.mrf.mxu0
      %v298 = vadd.f32 %v216, %v297
      %299 = vdwg.mxu0
      %v300 = vmax.f32 %v296, 0.0
      %v301 = vmax.f32 %v298, 0.0
      %302 = vst [vmem:[%s208] sm:$0xff] %v300
      %303 = vst [vmem:[%s208 + $0x8] sm:$0xff] %v301
      %s304 = smul.u32 2, %s19
      %p305 = scmp.lt.s32.totalorder %s18, 1
      %s306 = scalar_select %p305, %s18, 1
      %p307 = scmp.lt.s32.totalorder %s304, 1
      %s308 = scalar_select %p307, %s304, 1
      %s309 = smul.addr %s306, 2
      %s310 = sadd.s32 %s308, %s309
      %s311 = smul.addr %s310, 8
      %s312 = scalar_lea.vmem %s3, %s311
      // Predicated region
      $region33: #{feature_adapter_forward.3} parent=31 // pred_check
        %p313 = pneg %p116
      $region34: #{feature_adapter_forward.3} parent=31 // pred_check_branch
        %315 = sbr.rel (%p313) target = $region36
      $region35: #{feature_adapter_forward.3} parent=31 // pred_region
        %s316 = smul.u32 2, %s19
      $region36: #{feature_adapter_forward.3} parent=31 // pred_fallthru
        _
    $region32: #{feature_adapter_forward.3} parent=5 // pred_fallthru
      _
    %p317 = scmp.le.s32.totalorder 2, %s9
    // Predicated region
    $region37: #{feature_adapter_forward.3} parent=5 // pred_check
      %p318 = pneg %p317
    $region38: #{feature_adapter_forward.3} parent=5 // pred_check_branch
      %320 = sbr.rel (%p318) target = $region40
    $region39: #{feature_adapter_forward.3} parent=5 // pred_region
      %s321 = ssub.s32 %s9, 2
      // Predicated region
      $region41: #{feature_adapter_forward.3} parent=39 // pred_check
        %p322 = pneg %p122
      $region42: #{feature_adapter_forward.3} parent=39 // pred_check_branch
        %324 = sbr.rel (%p322) target = $region44
      $region43: #{feature_adapter_forward.3} parent=39 // pred_region
        %s325 = smul.u32 2, %s21
        %p326 = scmp.lt.s32.totalorder %s20, 1
        %s327 = scalar_select %p326, %s20, 1
        %p328 = scmp.lt.s32.totalorder %s325, 1
        %s329 = scalar_select %p328, %s325, 1
        %s330 = smul.addr %s327, 2
        %s331 = sadd.s32 %s329, %s330
        %s332 = smul.addr %s331, 8
        %s333 = scalar_lea.vmem %s3, %s332
      $region44: #{feature_adapter_forward.3} parent=39 // pred_fallthru
        _
    $region40: #{feature_adapter_forward.3} parent=5 // pred_fallthru
      _
  $region6: #{feature_adapter_forward.3} parent=0 // loop_footer
    %s13 = sadd.s32 1, %s9
  $region7: #{feature_adapter_forward.3} parent=0 // loop_footer_branch
    %8 = sbr.rel target = $region3
  $region8: #{feature_adapter_forward.3} parent=0 // loop_exit
    _

</llo_original>
